<compile_context>
chip_gen: v6e
topology: v6e:2x2x1
jax: 0.10.0
libtpu: 0.0.40
codegen_flags: <defaults>
</compile_context>

<pallas_src>
import functools

import jax
import jax.numpy as jnp
from jax.experimental import pallas as pl
from jax.experimental.pallas import tpu as pltpu


def _round_up(x: int, m: int) -> int:
    return ((x + m - 1) // m) * m


def _model_kernel(x_ref, w_ref, b_ref, out_ref):
    """out = x @ W + b  — single fused MXU dot, lane-dense store."""
    acc = jnp.dot(x_ref[...], w_ref[...], preferred_element_type=jnp.float32)
    out_ref[...] = (acc + b_ref[...]).astype(out_ref.dtype)


def _fused_linear_dynamics(x, w, b):
    """x: (B, K) f32, w: (K, N_pad) f32, b: (1, N_pad) f32 -> (Bp, N_pad) f32.

    Batch is tiled along a parallel grid axis; weights/bias are resident
    (constant index_map).  Bp >= B is the sublane/tile-padded batch.
    """
    B, K = x.shape
    K2, N_pad = w.shape
    assert K == K2 and N_pad % 128 == 0

    # Sublane-align the batch, then pick a batch tile (<= 512 rows).
    TB = min(512, _round_up(B, 8))
    Bp = _round_up(B, TB)
    if Bp != B:
        x = jnp.pad(x, ((0, Bp - B), (0, 0)))

    return pl.pallas_call(
        _model_kernel,
        out_shape=jax.ShapeDtypeStruct((Bp, N_pad), jnp.float32),
        grid=(Bp // TB,),
        in_specs=[
            pl.BlockSpec((TB, K), lambda i: (i, 0)),       # activations: tiled on batch
            pl.BlockSpec((K, N_pad), lambda i: (0, 0)),    # fused weight: resident
            pl.BlockSpec((1, N_pad), lambda i: (0, 0)),    # bias: resident
        ],
        out_specs=pl.BlockSpec((TB, N_pad), lambda i: (i, 0)),
        compiler_params=pltpu.CompilerParams(
            dimension_semantics=("parallel",),
        ),
    )(x, w, b)


@functools.partial(jax.jit, static_argnames=("n_features", "n_add", "mode"))
def _forward_jit(f_t, a_t, w_fused, b_fused, *, n_features, n_add, mode):
    """One jitted executable: concat inputs, run kernel, slice padded lanes."""
    x = jnp.concatenate(
        [f_t.astype(jnp.float32), a_t.astype(jnp.float32)], axis=1
    )
    out = _fused_linear_dynamics(x, w_fused, b_fused)
    out = out[: f_t.shape[0]]                      # drop batch padding
    if mode == "all":
        return out[:, :n_features], out[:, n_features:n_features + n_add]
    if mode == "additional":
        return out[:, : n_features + n_add]
    return out[:, :n_features]


class Model:
    """JAX/Pallas mirror of the PyTorch Model base class (linear-dynamics forward)."""

    def __init__(self, feature_shape, action_shape, additional_feature_shape, key):
        self.feature_shape = tuple(feature_shape) if len(feature_shape) else (1,)
        self.action_shape = tuple(action_shape) if len(action_shape) else (1,)
        self.additional_feature_shape = (
            tuple(additional_feature_shape) if len(additional_feature_shape) else (1,)
        )
        assert len(self.feature_shape) == 1
        self.n_features = self.feature_shape[0]
        self.n_actions = self.action_shape[0]
        self.n_add = self.additional_feature_shape[0]
        self.n_out = self.n_features + self.n_add
        self.k_in = self.n_features + self.n_actions
        # Lane-dense padded output width (unmasked 128-wide stores in the kernel).
        self.n_out_pad = max(128, _round_up(self.n_out, 128))

        # Deterministic nn.Linear-style init (transposed to (in, out) for the kernel).
        k1, k2, k3 = jax.random.split(key, 3)
        scale_f = 1.0 / (self.n_features ** 0.5)
        scale_a = 1.0 / (self.n_actions ** 0.5)
        self.wf_t = (jax.random.uniform(k1, (self.n_features, self.n_out), jnp.float32) * 2 - 1) * scale_f
        self.wa_t = (jax.random.uniform(k2, (self.n_actions, self.n_out), jnp.float32) * 2 - 1) * scale_a
        self.b = (jax.random.uniform(k3, (1, self.n_out), jnp.float32) * 2 - 1) * scale_f

        # Fuse the two weight matrices into one (K, N_pad) operand and pad the
        # output dimension so the kernel's stores are lane-dense.
        w_fused = jnp.zeros((self.k_in, self.n_out_pad), jnp.float32)
        w_fused = w_fused.at[: self.n_features, : self.n_out].set(self.wf_t)
        w_fused = w_fused.at[self.n_features :, : self.n_out].set(self.wa_t)
        self.w_fused = w_fused
        b_fused = jnp.zeros((1, self.n_out_pad), jnp.float32)
        self.b_fused = b_fused.at[:, : self.n_out].set(self.b)

    def forward(self, f_t, a_t, additional=False, all=False):
        mode = "all" if all else ("additional" if additional else "features")
        return _forward_jit(
            f_t, a_t, self.w_fused, self.b_fused,
            n_features=self.n_features, n_add=self.n_add, mode=mode,
        )

    def sparsify_me(self):
        # Matches base class semantics (no tensors registered for sparsification).
        return []
        # TODO(synk): concrete subclasses would return [("fc.weight", self.w_fused)].


if __name__ == "__main__":
    key = jax.random.PRNGKey(0)
    k_model, k_f, k_a = jax.random.split(key, 3)

    batch = 8
    feature_shape = (32,)
    action_shape = (8,)
    additional_feature_shape = (4,)

    model = Model(feature_shape, action_shape, additional_feature_shape, k_model)

    f_t = jax.random.normal(k_f, (batch,) + feature_shape, jnp.float32)
    a_t = jax.random.normal(k_a, (batch,) + action_shape, jnp.float32)

    out_feat = model.forward(f_t, a_t)                       # (B, n_features)
    out_full = model.forward(f_t, a_t, additional=True)      # (B, n_features + n_add)
    feats, add = model.forward(f_t, a_t, all=True)
    jax.block_until_ready((out_feat, out_full, feats, add))

    # Pure-JAX reference check.
    ref_full = f_t @ model.wf_t + a_t @ model.wa_t + model.b
    assert out_full.shape == (batch, feature_shape[0] + additional_feature_shape[0])
    assert out_feat.shape == (batch, feature_shape[0])
    assert jnp.allclose(out_full, ref_full, atol=1e-5, rtol=1e-5)
    assert jnp.allclose(out_feat, ref_full[:, : feature_shape[0]], atol=1e-5, rtol=1e-5)
    assert jnp.allclose(feats, ref_full[:, : feature_shape[0]], atol=1e-5, rtol=1e-5)
    assert jnp.allclose(add, ref_full[:, feature_shape[0] :], atol=1e-5, rtol=1e-5)

    # Ragged-batch path (zero-padded to a sublane multiple inside the wrapper).
    f5, a5 = f_t[:5], a_t[:5]
    out5 = model.forward(f5, a5, additional=True)
    jax.block_until_ready(out5)
    assert out5.shape == (5, model.n_out)
    assert jnp.allclose(out5, ref_full[:5], atol=1e-5, rtol=1e-5)

    print("KERNEL_OK")
</pallas_src>

<mosaic_0001>
module attributes {stable_mosaic.version = 11 : i64} {
  func.func @_model_kernel(%arg0: i32, %arg1: memref<8x40xf32, #tpu.memory_space<vmem>>, %arg2: memref<40x128xf32, #tpu.memory_space<vmem>>, %arg3: memref<1x128xf32, #tpu.memory_space<vmem>>, %arg4: memref<8x128xf32, #tpu.memory_space<vmem>>) attributes {dimension_semantics = [#tpu.dimension_semantics<parallel>], iteration_bounds = array<i64: 1>, scalar_prefetch = 0 : i64, scratch_operands = 0 : i64, tpu.core_type = #tpu.core_type<tc>, window_params = [{transform_indices = @transform_0, window_bounds = array<i64: 8, 40>}, {pipeline_mode = #tpu.pipeline_mode<synchronous>, transform_indices = @transform_1, window_bounds = array<i64: 40, 128>}, {pipeline_mode = #tpu.pipeline_mode<synchronous>, transform_indices = @transform_2, window_bounds = array<i64: 1, 128>}, {transform_indices = @transform_3, window_bounds = array<i64: 8, 128>}]} {
    %c0 = arith.constant 0 : index
    %c0_0 = arith.constant 0 : index
    %0 = vector.load %arg1[%c0, %c0_0] : memref<8x40xf32, #tpu.memory_space<vmem>>, vector<8x40xf32>
    %c0_1 = arith.constant 0 : index
    %c0_2 = arith.constant 0 : index
    %1 = vector.load %arg2[%c0_1, %c0_2] : memref<40x128xf32, #tpu.memory_space<vmem>>, vector<40x128xf32>
    %cst = arith.constant dense<0.000000e+00> : vector<8x128xf32>
    %2 = tpu.matmul %0, %1, %cst {dimension_numbers = #tpu.dot_dimension_numbers<[1], [0], [0], [1], [0, 0, 1, 1], [], []>} : vector<8x40xf32>, vector<40x128xf32>, vector<8x128xf32> -> vector<8x128xf32>
    %c0_3 = arith.constant 0 : index
    %c0_4 = arith.constant 0 : index
    %3 = vector.load %arg3[%c0_3, %c0_4] : memref<1x128xf32, #tpu.memory_space<vmem>>, vector<1x128xf32>
    %4 = vector.broadcast %3 : vector<1x128xf32> to vector<8x128xf32>
    %5 = arith.addf %2, %4 : vector<8x128xf32>
    %c0_5 = arith.constant 0 : index
    %c0_6 = arith.constant 0 : index
    %6 = vector.load %arg4[%c0_5, %c0_6] : memref<8x128xf32, #tpu.memory_space<vmem>>, vector<8x128xf32>
    tpu.vector_store %arg4[%c0_5, %c0_6], %5 {strides = array<i32>} : memref<8x128xf32, #tpu.memory_space<vmem>>, vector<8x128xf32>,
    return
  }
  func.func @transform_0(%arg0: i32) -> (i32, i32) {
    %c0_i32 = arith.constant 0 : i32
    %c0_i32_0 = arith.constant 0 : i32
    return %arg0, %c0_i32 : i32, i32
  }
  func.func @transform_1(%arg0: i32) -> (i32, i32) {
    %c0_i32 = arith.constant 0 : i32
    %c0_i32_0 = arith.constant 0 : i32
    %c0_i32_1 = arith.constant 0 : i32
    return %c0_i32, %c0_i32_0 : i32, i32
  }
  func.func @transform_2(%arg0: i32) -> (i32, i32) {
    %c0_i32 = arith.constant 0 : i32
    %c0_i32_0 = arith.constant 0 : i32
    %c0_i32_1 = arith.constant 0 : i32
    return %c0_i32, %c0_i32_0 : i32, i32
  }
  func.func @transform_3(%arg0: i32) -> (i32, i32) {
    %c0_i32 = arith.constant 0 : i32
    %c0_i32_0 = arith.constant 0 : i32
    return %arg0, %c0_i32 : i32, i32
  }
}

</mosaic_0001>

<llo_original>
// kernel: _forward_jit.1
$region0: #{_forward_jit.1}
  #allocation0 [shape = 'u32[]', space=smem, size = 0x4, offset = 0x4, fixed_abs, tag = 'smem constant byte address 0x4 - core index']
  #allocation1 [shape = 'u32[144,128]{1,0:T(1,128)}', space=vmem, size = 0x12000, scoped, tag = 'internal scratch']
  %s0 = inlined_call_operand.vmem [shape: f32[8,40], index: 0, kind: input, shape index: {}]
  %s1 = inlined_call_operand.hbm [shape: f32[40,128], index: 1, kind: input, shape index: {}]
  %s2 = inlined_call_operand.vmem [shape: f32[1,128], index: 2, kind: input, shape index: {}]
  %s3 = inlined_call_operand.hbm [shape: f32[8,128], index: 3, kind: output, shape index: {}]
  %s4 = sld [smem:[#allocation0]]
  $region26: #{_forward_jit.1} parent=0
    _
  %s6 = ssub.s32 1, %s4
  %s7 = scalar_select 0, %s6, %s4
  $region1: #{_forward_jit.1} parent=0
    #allocation2 [shape = 'u8[20480]{0}', space=vmem, size = 0x5000, scoped, tag = 'input window, operand 1, single buffered']
    #allocation3 [shape = 's32[1]{0}', space=sflag, size = 0x4, scoped, tag = 'scoped memory for _forward_jit.1']
    #allocation4 [shape = 's32[1]{0}', space=sflag, size = 0x4, scoped, tag = 'scoped memory for _forward_jit.1']
    #allocation5 [shape = 'u8[4096]{0}', space=vmem, size = 0x1000, scoped, tag = 'output window, operand 0, single buffered']
    %8 = vsyncpa [#allocation3], 0
    %9 = vsyncpa [#allocation4], 0
    // Predicated region
    $region2: #{_forward_jit.1} parent=1 // pred_check
      _
    $region3: #{_forward_jit.1} parent=1 // pred_check_branch
      %11 = sbr.rel (0) target = $region5
    $region4: #{_forward_jit.1} parent=1 // pred_region
      _
    $region5: #{_forward_jit.1} parent=1 // pred_fallthru
      _
    // Predicated region
    $region6: #{_forward_jit.1} parent=1 // pred_check
      _
    $region7: #{_forward_jit.1} parent=1 // pred_check_branch
      %13 = sbr.rel (0) target = $region9
    $region8: #{_forward_jit.1} parent=1 // pred_region
      %s15 = ssub.s32 640, 640
      %16 = vsyncadd [#allocation3], %s15
      %s17 = sshll.u32 [#allocation2], 4
      %s18 = int_to_ptr.vmem [resolvable:$true] %s17
      %23 = dma.hbm_to_vmem [thread:$0]  %s1, 640, %s18, [#allocation3], 128, 128, 8
    $region9: #{_forward_jit.1} parent=1 // pred_fallthru
      _
    // Predicated region
    $region10: #{_forward_jit.1} parent=1 // pred_check
      _
    $region11: #{_forward_jit.1} parent=1 // pred_check_branch
      %25 = sbr.rel (0) target = $region13
    $region12: #{_forward_jit.1} parent=1 // pred_region
      _
    $region13: #{_forward_jit.1} parent=1 // pred_fallthru
      _
    // Predicated region
    $region14: #{_forward_jit.1} parent=1 // pred_check
      _
    $region15: #{_forward_jit.1} parent=1 // pred_check_branch
      %27 = sbr.rel (0) target = $region17
    $region16: #{_forward_jit.1} parent=1 // pred_region
      %28 = dma.done [#allocation3], 640
    $region17: #{_forward_jit.1} parent=1 // pred_fallthru
      _
    %v29 = vld [vmem:[%s0] sm:$0xff]
    %v30 = vld [vmem:[#allocation2] sm:$0xff]
    %v31 = vld [vmem:[#allocation2 + $0x8] sm:$0xff]
    %v32 = vld [vmem:[#allocation2 + $0x10] sm:$0xff]
    %v33 = vld [vmem:[#allocation2 + $0x18] sm:$0xff]
    %v34 = vld [vmem:[#allocation2 + $0x20] sm:$0xff]
    %v35 = vld [vmem:[%s2] sm:$0x1]
    %v37 = vlaneseq
    %v38 = vshrl.u32 %v37, 7
    %v39 = vsub.s32 0, %v38
    %v40 = vrot.slane %v35, %v39
    %vm42 = vcmask 326656
    %v44 = vsel %vm42, %v29, 0
    %46 = vmatprep.subr.mxu0 0.0
    %47 = vmatpush1.msra.mxu0 0.0
    %48 = vmatprep.subr.mxu0 0.0
    %49 = vmatpush1.msra.mxu0 0.0
    %50 = vmatprep.subr.mxu0 0.0
    %51 = vmatpush1.msra.mxu0 0.0
    %52 = vmatprep.subr.mxu0 0.0
    %53 = vmatpush1.msra.mxu0 0.0
    %54 = vmatprep.subr.mxu0 0.0
    %55 = vmatpush1.msra.mxu0 0.0
    %56 = vmatprep.subr.mxu0 0.0
    %57 = vmatpush1.msra.mxu0 0.0
    %58 = vmatprep.subr.mxu0 0.0
    %59 = vmatpush1.msra.mxu0 0.0
    %60 = vmatprep.subr.mxu0 0.0
    %61 = vmatpush1.msra.mxu0 0.0
    %62 = vmatprep.subr.mxu0 0.0
    %63 = vmatpush1.msra.mxu0 0.0
    %64 = vmatprep.subr.mxu0 0.0
    %65 = vmatpush1.msra.mxu0 0.0
    %66 = vmatprep.subr.mxu0 0.0
    %67 = vmatpush1.msra.mxu0 0.0
    %68 = vmatprep.subr.mxu0 0.0
    %69 = vmatpush1.msra.mxu0 %v34
    %70 = vmatprep.subr.mxu0 0.0
    %71 = vmatpush1.msra.mxu0 %v33
    %72 = vmatprep.subr.mxu0 0.0
    %73 = vmatpush1.msra.mxu0 %v32
    %74 = vmatprep.subr.mxu0 0.0
    %75 = vmatpush1.msra.mxu0 %v31
    %76 = vmatprep.subr.mxu0 0.0
    %77 = vmatpush1.msra.mxu0 %v30
    %78 = vmatprep.subr.mxu0 0.0
    %79 = vmatpush2.msra.mxu0 0.0
    %80 = vmatprep.subr.mxu0 0.0
    %81 = vmatpush2.msra.mxu0 0.0
    %82 = vmatprep.subr.mxu0 0.0
    %83 = vmatpush2.msra.mxu0 0.0
    %84 = vmatprep.subr.mxu0 0.0
    %85 = vmatpush2.msra.mxu0 0.0
    %86 = vmatprep.subr.mxu0 0.0
    %87 = vmatpush2.msra.mxu0 0.0
    %88 = vmatprep.subr.mxu0 0.0
    %89 = vmatpush2.msra.mxu0 0.0
    %90 = vmatprep.subr.mxu0 0.0
    %91 = vmatpush2.msra.mxu0 0.0
    %92 = vmatprep.subr.mxu0 0.0
    %93 = vmatpush2.msra.mxu0 0.0
    %94 = vmatprep.subr.mxu0 0.0
    %95 = vmatpush2.msra.mxu0 0.0
    %96 = vmatprep.subr.mxu0 0.0
    %97 = vmatpush2.msra.mxu0 0.0
    %98 = vmatprep.subr.mxu0 0.0
    %99 = vmatpush2.msra.mxu0 0.0
    %100 = vmatprep.subr.mxu0 0.0
    %101 = vmatpush2.msra.mxu0 0.0
    %102 = vmatprep.subr.mxu0 0.0
    %103 = vmatpush2.msra.mxu0 0.0
    %104 = vmatprep.subr.mxu0 0.0
    %105 = vmatpush2.msra.mxu0 0.0
    %106 = vmatprep.subr.mxu0 0.0
    %107 = vmatpush2.msra.mxu0 0.0
    %108 = vmatprep.subr.mxu0 0.0
    %109 = vmatpush2.msra.mxu0 0.0
    %110 = vmatprep.mubr.f32.mxu0 0.0
    %111 = vmatmul.mubr.f32.gmra.mxu0 %v44
    %v112 = vpop.f32.mrf.mxu0
    %v113 = vadd.f32 %v40, %v112
    %v114 = vpop.f32.mrf.mxu0
    %115 = vdwg.mxu0
    %116 = vst [vmem:[#allocation5] sm:$0xff] %v113
    // Predicated region
    $region18: #{_forward_jit.1} parent=1 // pred_check
      _
    $region19: #{_forward_jit.1} parent=1 // pred_check_branch
      %118 = sbr.rel (0) target = $region21
    $region20: #{_forward_jit.1} parent=1 // pred_region
      %s120 = ssub.s32 128, 128
      %121 = vsyncadd [#allocation4], %s120
      %s123 = sshll.u32 [#allocation5], 4
      %s124 = int_to_ptr.vmem [resolvable:$true] %s123
      %126 = dma.vmem_to_hbm [thread:$0]  %s124, 128, %s3, [#allocation4]
    $region21: #{_forward_jit.1} parent=1 // pred_fallthru
      _
    // Predicated region
    $region22: #{_forward_jit.1} parent=1 // pred_check
      _
    $region23: #{_forward_jit.1} parent=1 // pred_check_branch
      %128 = sbr.rel (0) target = $region25
    $region24: #{_forward_jit.1} parent=1 // pred_region
      %129 = dma.done [#allocation4], 128
    $region25: #{_forward_jit.1} parent=1 // pred_fallthru
      _
    %130 = vsyncpa [#allocation3], 1
    %131 = vsyncpa [#allocation4], 1

</llo_original>
